<compile_context>
chip_gen: v7x
topology: tpu7x:2x2x1
jax: 0.10.0
libtpu: 0.0.40
codegen_flags: <defaults>
</compile_context>

<pallas_src>
import jax
import jax.numpy as jnp
from jax.experimental import pallas as pl
from jax.experimental.pallas import tpu as pltpu


def _round_up(x: int, m: int) -> int:
    return ((x + m - 1) // m) * m


def _sublane_multiple(dtype) -> int:
    itemsize = jnp.dtype(dtype).itemsize
    return {4: 8, 2: 16, 1: 32}.get(itemsize, 8)


def _choose_tile_n(n: int, c: int, itemsize: int, sub: int) -> int:
    # VMEM bytes per row, double-buffered, with lane padding to 128:
    #   logits: 2 * itemsize * round_up(C, 128)
    #   labels: a (tile_n, 1) i32 block pads each 8-row group to (8,128)
    #           -> 64 B/row per buffer, x2 buffers.
    c_pad = _round_up(c, 128)
    per_row = 2 * itemsize * c_pad + 2 * 64
    budget = 6 * 1024 * 1024  # ~6 MiB streaming working set (fits v5e 16 MiB scoped default)
    t = max(sub, (budget // per_row) // sub * sub)
    if n >= sub:
        # Never make the block taller than the (sublane-rounded-down) batch.
        t = min(t, (n // sub) * sub)
    return t


def _make_kernel(n_total: int, tile_n: int, c: int):
    # Only static Python ints/bools are closed over (no traced constants).
    needs_mask = (n_total % tile_n) != 0

    def kernel(logits_ref, target_ref, out_ref):
        pid = pl.program_id(0)

        logits = logits_ref[...].astype(jnp.float32)      # (tile_n, C)
        tgt = target_ref[...]                              # (tile_n, 1) int32

        if needs_mask:  # static branch: only emitted when a tail block exists
            row = (jax.lax.broadcasted_iota(jnp.int32, (tile_n, 1), 0)
                   + pid * tile_n)
            valid = row < n_total                           # (tile_n, 1) bool
            # Mask BEFORE max/exp: tail-block data is unspecified HBM/VMEM.
            logits = jnp.where(valid, logits, 0.0)

        # --- single exp pass (only N*C transcendental in the kernel) ---
        m = jnp.max(logits, axis=1, keepdims=True)          # (tile_n, 1)
        e = jnp.exp(logits - m)                              # (tile_n, C)
        sumexp = jnp.sum(e, axis=1, keepdims=True)           # (tile_n, 1)
        lse = m + jnp.log(sumexp)                             # (tile_n, 1)

        # Cross entropy per row: lse - logits[target]  (no one-hot temporary).
        col = jax.lax.broadcasted_iota(jnp.int32, (tile_n, c), 1)
        tgt_logit = jnp.sum(jnp.where(col == tgt, logits, 0.0),
                            axis=1, keepdims=True)            # (tile_n, 1)
        ce_row = lse - tgt_logit                               # (tile_n, 1)

        # ||softmax_row||^2 = sum(e^2) / sumexp^2  (reuses e; no second exp).
        r = pl.reciprocal(sumexp)                              # exact, per-row only
        sq_row = jnp.sum(e * e, axis=1, keepdims=True) * (r * r)

        if needs_mask:
            ce_row = jnp.where(valid, ce_row, 0.0)
            sq_row = jnp.where(valid, sq_row, 0.0)

        # Per-block partials -> lane-dense (1, 2, 128) output tile.
        ce_part = jnp.sum(ce_row)
        sq_part = jnp.sum(sq_row)
        sel = jax.lax.broadcasted_iota(jnp.int32, (1, 2, 128), 1) == 0
        out_ref[...] = jnp.where(sel, ce_part, sq_part)

    return kernel


def marginal_log_loss(output: jax.Array, target: jax.Array,
                      lambda_value: float, tile_n: int | None = None) -> jax.Array:
    """output: (N, C) float logits (f32 or bf16); target: (N,) integer labels."""
    n, c = output.shape
    sub = _sublane_multiple(output.dtype)
    if tile_n is None:
        tile_n = _choose_tile_n(n, c, output.dtype.itemsize, sub)
    else:
        tile_n = max(sub, (tile_n // sub) * sub)
    num_blocks = pl.cdiv(n, tile_n)

    target2d = target.astype(jnp.int32).reshape(n, 1)
    kernel = _make_kernel(n, tile_n, c)

    cost = pl.CostEstimate(
        flops=6 * n * c,
        transcendentals=n * c,
        bytes_accessed=(n * c * output.dtype.itemsize   # logits read
                        + 4 * n                          # labels read
                        + num_blocks * 2 * 128 * 4),     # partials written
    )

    partials = pl.pallas_call(
        kernel,
        out_shape=jax.ShapeDtypeStruct((num_blocks, 2, 128), jnp.float32),
        grid_spec=pltpu.PrefetchScalarGridSpec(
            num_scalar_prefetch=0,
            grid=(num_blocks,),
            in_specs=[
                pl.BlockSpec((tile_n, c), lambda i: (i, 0)),   # logits tile
                pl.BlockSpec((tile_n, 1), lambda i: (i, 0)),   # int32 labels
            ],
            out_specs=pl.BlockSpec((1, 2, 128), lambda i: (i, 0, 0)),
        ),
        compiler_params=pltpu.CompilerParams(
            # Independent per-block partials -> batch axis can shard across TCs.
            dimension_semantics=("parallel",),
        ),
        cost_estimate=cost,
    )(output, target2d)

    # Tiny final reduction + nonlinearity in plain JAX (num_blocks scalars).
    ce_sum = jnp.sum(partials[:, 0, 0])
    sq_sum = jnp.sum(partials[:, 1, 0])
    return ce_sum / jnp.float32(n) + jnp.float32(lambda_value) * jnp.log1p(sq_sum)


def _reference(output, target, lambda_value):
    # Pure-JAX reference mirroring the PyTorch module.
    logits = output.astype(jnp.float32)
    log_sm = jax.nn.log_softmax(logits, axis=1)
    n = logits.shape[0]
    ce = -jnp.mean(log_sm[jnp.arange(n), target])
    sm = jax.nn.softmax(logits, axis=1)
    return ce + lambda_value * jnp.log(1.0 + jnp.sum(sm * sm))


if __name__ == "__main__":
    key = jax.random.PRNGKey(0)
    k1, k2, k3, k4, k5, k6 = jax.random.split(key, 6)

    lambda_value = 0.1  # the module's only parameter (deterministic, in-script)

    # Case 1: small single-block case (batch=8 logits over 16 classes).
    N, C = 8, 16
    logits = jax.random.normal(k1, (N, C), dtype=jnp.float32)
    target = jax.random.randint(k2, (N,), 0, C, dtype=jnp.int32)
    loss = jax.block_until_ready(marginal_log_loss(logits, target, lambda_value))
    ref = _reference(logits, target, lambda_value)
    assert jnp.allclose(loss, ref, rtol=1e-5, atol=1e-5), (loss, ref)

    # Case 2: multi-block grid + in-kernel tail-row masking (N=20, tile_n=8).
    N2, C2 = 20, 16
    logits2 = jax.random.normal(k3, (N2, C2), dtype=jnp.float32)
    target2 = jax.random.randint(k4, (N2,), 0, C2, dtype=jnp.int32)
    loss2 = jax.block_until_ready(
        marginal_log_loss(logits2, target2, lambda_value, tile_n=8))
    ref2 = _reference(logits2, target2, lambda_value)
    assert jnp.allclose(loss2, ref2, rtol=1e-5, atol=1e-5), (loss2, ref2)

    # Case 3: bf16 logits streamed at half HBM bytes (f32 math in-kernel).
    N3, C3 = 32, 16
    logits3 = jax.random.normal(k5, (N3, C3), dtype=jnp.float32).astype(jnp.bfloat16)
    target3 = jax.random.randint(k6, (N3,), 0, C3, dtype=jnp.int32)
    loss3 = jax.block_until_ready(marginal_log_loss(logits3, target3, lambda_value))
    ref3 = _reference(logits3, target3, lambda_value)
    assert jnp.allclose(loss3, ref3, rtol=1e-4, atol=1e-4), (loss3, ref3)

    print("KERNEL_OK")
</pallas_src>

<mosaic_0001>
module attributes {stable_mosaic.version = 11 : i64} {
  func.func @kernel(%arg0: i32, %arg1: memref<8x16xf32, #tpu.memory_space<vmem>>, %arg2: memref<8x1xi32, #tpu.memory_space<vmem>>, %arg3: memref<1x2x128xf32, #tpu.memory_space<vmem>>) attributes {dimension_semantics = [#tpu.dimension_semantics<parallel>], iteration_bounds = array<i64: 1>, scalar_prefetch = 0 : i64, scratch_operands = 0 : i64, tpu.core_type = #tpu.core_type<tc>, window_params = [{transform_indices = @transform_0, window_bounds = array<i64: 8, 16>}, {transform_indices = @transform_1, window_bounds = array<i64: 8, 1>}, {transform_indices = @transform_2, window_bounds = array<i64: 1, 2, 128>}]} {
    %c0 = arith.constant 0 : index
    %c0_0 = arith.constant 0 : index
    %0 = vector.load %arg1[%c0, %c0_0] : memref<8x16xf32, #tpu.memory_space<vmem>>, vector<8x16xf32>
    %c0_1 = arith.constant 0 : index
    %c0_2 = arith.constant 0 : index
    %1 = vector.load %arg2[%c0_1, %c0_2] : memref<8x1xi32, #tpu.memory_space<vmem>>, vector<8x1xi32>
    %cst = arith.constant dense<0xFF800000> : vector<8xf32>
    %2 = vector.multi_reduction <maximumf>, %0, %cst [1] : vector<8x16xf32> to vector<8xf32>
    %3 = vector.shape_cast %2 : vector<8xf32> to vector<8x1xf32>
    %4 = vector.broadcast %3 : vector<8x1xf32> to vector<8x16xf32>
    %5 = arith.subf %0, %4 : vector<8x16xf32>
    %6 = math.exp %5 : vector<8x16xf32>
    %cst_3 = arith.constant dense<0.000000e+00> : vector<8xf32>
    %7 = vector.multi_reduction <add>, %6, %cst_3 [1] : vector<8x16xf32> to vector<8xf32>
    %8 = vector.shape_cast %7 : vector<8xf32> to vector<8x1xf32>
    %9 = math.log %8 : vector<8x1xf32>
    %10 = arith.addf %3, %9 : vector<8x1xf32>
    %11 = tpu.iota {dimensions = array<i32: 1>} : vector<8x16xi32>
    %12 = vector.broadcast %1 : vector<8x1xi32> to vector<8x16xi32>
    %13 = arith.cmpi eq, %11, %12 : vector<8x16xi32>
    %cst_4 = arith.constant 0.000000e+00 : f32
    %14 = vector.broadcast %cst_4 : f32 to vector<8x16xf32>
    %15 = arith.select %13, %0, %14 : vector<8x16xi1>, vector<8x16xf32>
    %cst_5 = arith.constant dense<0.000000e+00> : vector<8xf32>
    %16 = vector.multi_reduction <add>, %15, %cst_5 [1] : vector<8x16xf32> to vector<8xf32>
    %17 = vector.shape_cast %16 : vector<8xf32> to vector<8x1xf32>
    %18 = arith.subf %10, %17 : vector<8x1xf32>
    %19 = tpu.reciprocal %8 : vector<8x1xf32> -> vector<8x1xf32>
    %20 = arith.mulf %6, %6 : vector<8x16xf32>
    %cst_6 = arith.constant dense<0.000000e+00> : vector<8xf32>
    %21 = vector.multi_reduction <add>, %20, %cst_6 [1] : vector<8x16xf32> to vector<8xf32>
    %22 = vector.shape_cast %21 : vector<8xf32> to vector<8x1xf32>
    %23 = arith.mulf %19, %19 : vector<8x1xf32>
    %24 = arith.mulf %22, %23 : vector<8x1xf32>
    %25 = vector.shape_cast %18 : vector<8x1xf32> to vector<1x8x1xf32>
    %cst_7 = arith.constant dense<0.000000e+00> : vector<1xf32>
    %26 = vector.multi_reduction <add>, %25, %cst_7 [1, 2] : vector<1x8x1xf32> to vector<1xf32>
    %27 = vector.shape_cast %26 : vector<1xf32> to vector<1x1x1xf32>
    %28 = vector.extract %27[0, 0, 0] : f32 from vector<1x1x1xf32>
    %29 = vector.shape_cast %24 : vector<8x1xf32> to vector<1x8x1xf32>
    %cst_8 = arith.constant dense<0.000000e+00> : vector<1xf32>
    %30 = vector.multi_reduction <add>, %29, %cst_8 [1, 2] : vector<1x8x1xf32> to vector<1xf32>
    %31 = vector.shape_cast %30 : vector<1xf32> to vector<1x1x1xf32>
    %32 = vector.extract %31[0, 0, 0] : f32 from vector<1x1x1xf32>
    %33 = tpu.iota {dimensions = array<i32: 1>} : vector<1x2x128xi32>
    %c0_i32 = arith.constant 0 : i32
    %34 = vector.broadcast %c0_i32 : i32 to vector<1x2x128xi32>
    %35 = arith.cmpi eq, %33, %34 : vector<1x2x128xi32>
    %36 = vector.broadcast %28 : f32 to vector<1x2x128xf32>
    %37 = vector.broadcast %32 : f32 to vector<1x2x128xf32>
    %38 = arith.select %35, %36, %37 : vector<1x2x128xi1>, vector<1x2x128xf32>
    %c0_9 = arith.constant 0 : index
    %c0_10 = arith.constant 0 : index
    %c0_11 = arith.constant 0 : index
    %39 = vector.load %arg3[%c0_9, %c0_10, %c0_11] : memref<1x2x128xf32, #tpu.memory_space<vmem>>, vector<1x2x128xf32>
    tpu.vector_store %arg3[%c0_9, %c0_10, %c0_11], %38 {strides = array<i32>} : memref<1x2x128xf32, #tpu.memory_space<vmem>>, vector<1x2x128xf32>,
    return
  }
  func.func @transform_0(%arg0: i32) -> (i32, i32) {
    %c0_i32 = arith.constant 0 : i32
    %c0_i32_0 = arith.constant 0 : i32
    return %arg0, %c0_i32 : i32, i32
  }
  func.func @transform_1(%arg0: i32) -> (i32, i32) {
    %c0_i32 = arith.constant 0 : i32
    %c0_i32_0 = arith.constant 0 : i32
    return %arg0, %c0_i32 : i32, i32
  }
  func.func @transform_2(%arg0: i32) -> (i32, i32, i32) {
    %c0_i32 = arith.constant 0 : i32
    %c0_i32_0 = arith.constant 0 : i32
    %c0_i32_1 = arith.constant 0 : i32
    return %arg0, %c0_i32, %c0_i32_0 : i32, i32, i32
  }
}

</mosaic_0001>

<llo_original>
// kernel: tpu_custom_call.1
$region0: #{tpu_custom_call.1}
  #allocation0 [shape = 'u32[]', space=smem, size = 0x4, offset = 0x4, fixed_abs, tag = 'smem constant byte address 0x4 - core index']
  #allocation1 [shape = 'u32[144,128]{1,0:T(1,128)}', space=vmem, size = 0x12000, scoped, tag = 'internal scratch']
  %s0 = inlined_call_operand.vmem [shape: f32[8,16], index: 0, kind: input, shape index: {}]
  %s1 = inlined_call_operand.vmem [shape: s32[8,1], index: 1, kind: input, shape index: {}]
  %s2 = inlined_call_operand.hbm [shape: f32[1,2,128], index: 2, kind: output, shape index: {}]
  %s3 = sld [smem:[#allocation0]]
  $region18: #{tpu_custom_call.1} parent=0
    _
  %s5 = ssub.s32 1, %s3
  %s6 = scalar_select 0, %s5, %s3
  $region1: #{tpu_custom_call.1} parent=0
    #allocation2 [shape = 'u8[1024]{0}', space=vmem, size = 0x400, scoped, tag = 'output window, operand 0, single buffered']
    #allocation3 [shape = 's32[1]{0}', space=sflag, size = 0x4, scoped, tag = 'scoped memory for tpu_custom_call.1']
    %7 = vsyncpa [#allocation3], 0
    // Predicated region
    $region2: #{tpu_custom_call.1} parent=1 // pred_check
      _
    $region3: #{tpu_custom_call.1} parent=1 // pred_check_branch
      %9 = sbr.rel (0) target = $region5
    $region4: #{tpu_custom_call.1} parent=1 // pred_region
      _
    $region5: #{tpu_custom_call.1} parent=1 // pred_fallthru
      _
    // Predicated region
    $region6: #{tpu_custom_call.1} parent=1 // pred_check
      _
    $region7: #{tpu_custom_call.1} parent=1 // pred_check_branch
      %11 = sbr.rel (0) target = $region9
    $region8: #{tpu_custom_call.1} parent=1 // pred_region
      _
    $region9: #{tpu_custom_call.1} parent=1 // pred_fallthru
      _
    %v12 = vld [vmem:[%s0] sm:$0xff]
    %v13 = vld [vmem:[%s1] sm:$0xff]
    %vm14 = vcmask 130048
    %v15 = vsel %vm14, %v12, -inf
    %16 = vmax.xlane.f32.xlu0 %v15
    %v17 = vpop.xlane.xlu0 %16
    %v18 = vsub.f32 %v12, %v17
    %v19 = vmul.f32 %v18, 1.442695
    %v20 = vpow.pop %v19
    %v21 = vsel %vm14, %v20, 0.0
    %22 = vadd.xlane.f32.xlu0 %v21
    %v23 = vpop.xlane.xlu0 %22
    %v24 = vlog2.pop %v23
    %v25 = vmul.f32 %v24, 0.6931472
    %v26 = vadd.f32 %v17, %v25
    %v27 = vlaneseq
    %v28 = vand.u32 %v27, 127
    %29 = vset.pattern.permute.xlu0 0
    %30 = vperm.xlu0 %29, %v13
    %v31 = vpop.permute.xlu0 %30
    %vm32 = vcmp.eq.s32.totalorder %v28, %v31
    %v33 = vsel %vm32, %v12, 0.0
    %v34 = vsel %vm14, %v33, 0.0
    %35 = vadd.xlane.f32.xlu0 %v34
    %v36 = vpop.xlane.xlu0 %35
    %v37 = vsub.f32 %v26, %v36
    %v38 = vrcp.pop %v23
    %v39 = vmul.f32 %v20, %v20
    %v40 = vsel %vm14, %v39, 0.0
    %41 = vadd.xlane.f32.xlu0 %v40
    %v42 = vpop.xlane.xlu0 %41
    %v43 = vmul.f32 %v38, %v38
    %v44 = vmul.f32 %v42, %v43
    %vm45 = vcmask 7168
    %v46 = vsel %vm45, %v37, 0.0
    %47 = vadd.xlane.f32.xlu0 %v46
    %v48 = vpop.xlane.xlu0 %47
    %v49 = vrot.slane %v48, 4
    %v50 = vadd.f32 %v48, %v49
    %v51 = vrot.slane %v50, 2
    %v52 = vadd.f32 %v50, %v51
    %v53 = vrot.slane %v52, 1
    %v54 = vadd.f32 %v52, %v53
    %s55 = vtos %v54
    %v56 = vsel %vm45, %v44, 0.0
    %57 = vadd.xlane.f32.xlu0 %v56
    %v58 = vpop.xlane.xlu0 %57
    %v59 = vrot.slane %v58, 4
    %v60 = vadd.f32 %v58, %v59
    %v61 = vrot.slane %v60, 2
    %v62 = vadd.f32 %v60, %v61
    %v63 = vrot.slane %v62, 1
    %v64 = vadd.f32 %v62, %v63
    %s65 = vtos %v64
    %v66 = vlaneseq
    %v67 = vshrl.u32 %v66, 7
    %vm68 = vcmp.eq.s32.totalorder %v67, 0
    %v69 = vstv %s55
    %v70 = vstv %s65
    %v71 = vsel %vm68, %v69, %v70
    %72 = vst [vmem:[#allocation2] sm:$0x3] %v71
    // Predicated region
    $region10: #{tpu_custom_call.1} parent=1 // pred_check
      _
    $region11: #{tpu_custom_call.1} parent=1 // pred_check_branch
      %74 = sbr.rel (0) target = $region13
    $region12: #{tpu_custom_call.1} parent=1 // pred_region
      %s76 = ssub.s32 32, 32
      %77 = vsyncadd [#allocation3], %s76
      %s79 = sshll.u32 [#allocation2], 4
      %s80 = int_to_ptr.vmem [resolvable:$true] %s79
      %82 = dma.vmem_to_hbm [thread:$0]  %s80, 32, %s2, [#allocation3]
    $region13: #{tpu_custom_call.1} parent=1 // pred_fallthru
      _
    // Predicated region
    $region14: #{tpu_custom_call.1} parent=1 // pred_check
      _
    $region15: #{tpu_custom_call.1} parent=1 // pred_check_branch
      %84 = sbr.rel (0) target = $region17
    $region16: #{tpu_custom_call.1} parent=1 // pred_region
      %85 = dma.done [#allocation3], 32
    $region17: #{tpu_custom_call.1} parent=1 // pred_fallthru
      _
    %86 = vsyncpa [#allocation3], 1

</llo_original>
